<compile_context>
chip_gen: v6e
topology: v6e:2x2x1
jax: 0.10.0
libtpu: 0.0.40
codegen_flags: <defaults>
</compile_context>

<pallas_src>
import jax
import jax.numpy as jnp
from jax.experimental import pallas as pl
from jax.experimental.pallas import tpu as pltpu


def _round_up(x, m):
    return ((x + m - 1) // m) * m


def _linear_f1_kernel(x_ref, w_ref, b_ref, o_ref):
    # x_ref: (TM, D) VMEM tile, w_ref: (1, D) VMEM row, b_ref: (1, 1) SMEM scalar.
    # y = sum_d x[:, d] * w[d]  + b   -- VPU multiply + XLU lane reduction,
    # accumulated in f32 (no MXU involvement for the F=1 case).
    xw = x_ref[...].astype(jnp.float32) * w_ref[...].astype(jnp.float32)
    acc = jnp.sum(xw, axis=-1, keepdims=True)          # (TM, 1) f32
    o_ref[...] = (acc + b_ref[0, 0].astype(jnp.float32)).astype(o_ref.dtype)


def module_forward(x, w, b):
    """Pallas equivalent of Module.forward(X) == self.net(X) == Linear(X).

    x: [N, D], w: [D, 1], b: [1, 1] (or [1]).  Returns [N, 1].
    """
    n, d = x.shape
    d2, f = w.shape
    assert d == d2 and f == 1
    b2 = jnp.asarray(b, dtype=x.dtype).reshape(1, 1)
    w_row = w.T  # (1, D): lane-dense row vector for the VPU broadcast-multiply.

    # Batch tile: biggest that keeps double-buffered tiles comfortably inside
    # the scoped-VMEM default on every generation (v7x has only 64 MiB VMEM).
    tm = min(512, _round_up(n, 8))
    n_pad = _round_up(n, tm)
    if n_pad != n:
        x = jnp.pad(x, ((0, n_pad - n), (0, 0)))

    out = pl.pallas_call(
        _linear_f1_kernel,
        out_shape=jax.ShapeDtypeStruct((n_pad, f), x.dtype),
        grid=(n_pad // tm,),
        in_specs=[
            pl.BlockSpec((tm, d), lambda i: (i, 0)),                 # X tiles
            pl.BlockSpec((1, d), lambda i: (0, 0)),                  # W row (whole)
            pl.BlockSpec(memory_space=pltpu.MemorySpace.SMEM),       # bias scalar
        ],
        out_specs=pl.BlockSpec((tm, f), lambda i: (i, 0)),
        compiler_params=pltpu.CompilerParams(
            dimension_semantics=("parallel",),   # row-wise independent -> 2 TCs on v7x
        ),
    )(x, w_row, b2)
    return out[:n]


if __name__ == "__main__":
    key = jax.random.PRNGKey(0)
    kx, kw, kb, kx2 = jax.random.split(key, 4)

    # Small shapes consistent with a Linear(32 -> 1) net: batch=8, features=32.
    batch, features, out_features = 8, 32, 1
    x = jax.random.normal(kx, (batch, features), dtype=jnp.float32)
    w = jax.random.normal(kw, (features, out_features), dtype=jnp.float32) * 0.01
    b = jax.random.normal(kb, (1, out_features), dtype=jnp.float32) * 0.1

    y = module_forward(x, w, b)
    jax.block_until_ready(y)
    y_ref = x @ w + b
    assert y.shape == (batch, out_features)
    assert jnp.allclose(y, y_ref, atol=1e-5, rtol=1e-5)

    # Second check: non-multiple-of-tile batch exercises the padded multi-tile grid.
    batch2 = 1030
    x2 = jax.random.normal(kx2, (batch2, features), dtype=jnp.float32)
    y2 = module_forward(x2, w, b)
    jax.block_until_ready(y2)
    y2_ref = x2 @ w + b
    assert y2.shape == (batch2, out_features)
    assert jnp.allclose(y2, y2_ref, atol=1e-4, rtol=1e-4)

    print("KERNEL_OK")
</pallas_src>

<mosaic_0001>
module attributes {stable_mosaic.version = 11 : i64} {
  func.func @_linear_f1_kernel(%arg0: i32, %arg1: memref<8x32xf32, #tpu.memory_space<vmem>>, %arg2: memref<1x32xf32, #tpu.memory_space<vmem>>, %arg3: memref<1x1xf32, #tpu.memory_space<smem>>, %arg4: memref<8x1xf32, #tpu.memory_space<vmem>>) attributes {dimension_semantics = [#tpu.dimension_semantics<parallel>], iteration_bounds = array<i64: 1>, scalar_prefetch = 0 : i64, scratch_operands = 0 : i64, tpu.core_type = #tpu.core_type<tc>, window_params = [{transform_indices = @transform_0, window_bounds = array<i64: 8, 32>}, {pipeline_mode = #tpu.pipeline_mode<synchronous>, transform_indices = @transform_1, window_bounds = array<i64: 1, 32>}, {transform_indices = @transform_2, window_bounds = array<i64: 1, 1>}, {transform_indices = @transform_3, window_bounds = array<i64: 8, 1>}]} {
    %c0 = arith.constant 0 : index
    %c0_0 = arith.constant 0 : index
    %0 = vector.load %arg1[%c0, %c0_0] : memref<8x32xf32, #tpu.memory_space<vmem>>, vector<8x32xf32>
    %c0_1 = arith.constant 0 : index
    %c0_2 = arith.constant 0 : index
    %1 = vector.load %arg2[%c0_1, %c0_2] : memref<1x32xf32, #tpu.memory_space<vmem>>, vector<1x32xf32>
    %2 = vector.broadcast %1 : vector<1x32xf32> to vector<8x32xf32>
    %3 = arith.mulf %0, %2 : vector<8x32xf32>
    %cst = arith.constant dense<0.000000e+00> : vector<8xf32>
    %4 = vector.multi_reduction <add>, %3, %cst [1] : vector<8x32xf32> to vector<8xf32>
    %5 = vector.shape_cast %4 : vector<8xf32> to vector<8x1xf32>
    %c0_3 = arith.constant 0 : index
    %c0_4 = arith.constant 0 : index
    %6 = memref.load %arg3[%c0_3, %c0_4] : memref<1x1xf32, #tpu.memory_space<smem>>
    %7 = vector.broadcast %6 : f32 to vector<8x1xf32>
    %8 = arith.addf %5, %7 : vector<8x1xf32>
    %c0_5 = arith.constant 0 : index
    %c0_6 = arith.constant 0 : index
    %9 = vector.load %arg4[%c0_5, %c0_6] : memref<8x1xf32, #tpu.memory_space<vmem>>, vector<8x1xf32>
    tpu.vector_store %arg4[%c0_5, %c0_6], %8 {strides = array<i32>} : memref<8x1xf32, #tpu.memory_space<vmem>>, vector<8x1xf32>,
    return
  }
  func.func @transform_0(%arg0: i32) -> (i32, i32) {
    %c0_i32 = arith.constant 0 : i32
    %c0_i32_0 = arith.constant 0 : i32
    return %arg0, %c0_i32 : i32, i32
  }
  func.func @transform_1(%arg0: i32) -> (i32, i32) {
    %c0_i32 = arith.constant 0 : i32
    %c0_i32_0 = arith.constant 0 : i32
    %c0_i32_1 = arith.constant 0 : i32
    return %c0_i32, %c0_i32_0 : i32, i32
  }
  func.func @transform_2(%arg0: i32) -> (i32, i32) {
    %c0_i32 = arith.constant 0 : i32
    %c0_i32_0 = arith.constant 0 : i32
    %c0_i32_1 = arith.constant 0 : i32
    return %c0_i32, %c0_i32_0 : i32, i32
  }
  func.func @transform_3(%arg0: i32) -> (i32, i32) {
    %c0_i32 = arith.constant 0 : i32
    %c0_i32_0 = arith.constant 0 : i32
    return %arg0, %c0_i32 : i32, i32
  }
}

</mosaic_0001>

<llo_original>
// kernel: tpu_custom_call.1
$region0: #{tpu_custom_call.1}
  #allocation0 [shape = 'u32[]', space=smem, size = 0x4, offset = 0x4, fixed_abs, tag = 'smem constant byte address 0x4 - core index']
  #allocation1 [shape = 'u32[144,128]{1,0:T(1,128)}', space=vmem, size = 0x12000, scoped, tag = 'internal scratch']
  #allocation2 [shape = 'f32[1,1]{1,0:T(1,128)S(6)}', space=smem, size = 0x200, scoped, tag = 'scoped memory for tpu_custom_call.1']
  %s0 = inlined_call_operand.hbm [shape: f32[8,32], index: 0, kind: input, shape index: {}]
  %s1 = inlined_call_operand.vmem [shape: f32[1,32], index: 1, kind: input, shape index: {}]
  %s2 = inlined_call_operand.<no memory space> [shape: f32[1,1], index: 2, kind: input, shape index: {}]
  %s3 = inlined_call_operand.vmem [shape: f32[8,1], index: 3, kind: output, shape index: {}]
  %s4 = sld [smem:[#allocation0]]
  $region26: #{tpu_custom_call.1} parent=0
    _
  %s6 = ssub.s32 1, %s4
  %s7 = scalar_select 0, %s6, %s4
  %8 = sst [smem:[#allocation2]] %s2
  $region1: #{tpu_custom_call.1} parent=0
    #allocation3 [shape = 'u8[4096]{0}', space=vmem, size = 0x1000, scoped, tag = 'input window, operand 0, single buffered']
    #allocation4 [shape = 's32[1]{0}', space=sflag, size = 0x4, scoped, tag = 'scoped memory for tpu_custom_call.1']
    %9 = vsyncpa [#allocation4], 0
    // Predicated region
    $region2: #{tpu_custom_call.1} parent=1 // pred_check
      _
    $region3: #{tpu_custom_call.1} parent=1 // pred_check_branch
      %11 = sbr.rel (0) target = $region5
    $region4: #{tpu_custom_call.1} parent=1 // pred_region
      %s13 = ssub.s32 128, 128
      %14 = vsyncadd [#allocation4], %s13
      %s16 = sshll.u32 [#allocation3], 4
      %s17 = int_to_ptr.vmem [resolvable:$true] %s16
      %19 = dma.hbm_to_vmem [thread:$0]  %s0, 128, %s17, [#allocation4]
    $region5: #{tpu_custom_call.1} parent=1 // pred_fallthru
      _
    // Predicated region
    $region6: #{tpu_custom_call.1} parent=1 // pred_check
      _
    $region7: #{tpu_custom_call.1} parent=1 // pred_check_branch
      %21 = sbr.rel (0) target = $region9
    $region8: #{tpu_custom_call.1} parent=1 // pred_region
      _
    $region9: #{tpu_custom_call.1} parent=1 // pred_fallthru
      _
    // Predicated region
    $region10: #{tpu_custom_call.1} parent=1 // pred_check
      _
    $region11: #{tpu_custom_call.1} parent=1 // pred_check_branch
      %23 = sbr.rel (0) target = $region13
    $region12: #{tpu_custom_call.1} parent=1 // pred_region
      _
    $region13: #{tpu_custom_call.1} parent=1 // pred_fallthru
      _
    // Predicated region
    $region14: #{tpu_custom_call.1} parent=1 // pred_check
      _
    $region15: #{tpu_custom_call.1} parent=1 // pred_check_branch
      %25 = sbr.rel (0) target = $region17
    $region16: #{tpu_custom_call.1} parent=1 // pred_region
      %26 = dma.done [#allocation4], 128
    $region17: #{tpu_custom_call.1} parent=1 // pred_fallthru
      _
    %v27 = vld [vmem:[#allocation3] sm:$0xff]
    %v28 = vld [vmem:[%s1] sm:$0x1]
    %v30 = vlaneseq
    %v31 = vshrl.u32 %v30, 7
    %v32 = vsub.s32 0, %v31
    %v33 = vrot.slane %v28, %v32
    %v35 = vmul.f32 %v27, %v33
    %vm36 = vcmask 261120
    %v37 = vsel %vm36, %v35, 0.0
    %38 = vadd.xlane.f32.xlu0 %v37
    %v39 = vpop.xlane.xlu0 %38
    %s40 = sld [smem:[#allocation2]]
    %v41 = vstv %s40
    %v42 = vadd.f32 %v39, %v41
    %vm43 = vcmask 7168
    %44 = vst.msk [vmem:[%s3] sm:$0xff] %vm43, %v42
    // Predicated region
    $region18: #{tpu_custom_call.1} parent=1 // pred_check
      _
    $region19: #{tpu_custom_call.1} parent=1 // pred_check_branch
      %46 = sbr.rel (0) target = $region21
    $region20: #{tpu_custom_call.1} parent=1 // pred_region
      _
    $region21: #{tpu_custom_call.1} parent=1 // pred_fallthru
      _
    // Predicated region
    $region22: #{tpu_custom_call.1} parent=1 // pred_check
      _
    $region23: #{tpu_custom_call.1} parent=1 // pred_check_branch
      %48 = sbr.rel (0) target = $region25
    $region24: #{tpu_custom_call.1} parent=1 // pred_region
      _
    $region25: #{tpu_custom_call.1} parent=1 // pred_fallthru
      _
    %49 = vsyncpa [#allocation4], 1

</llo_original>
